<compile_context>
chip_gen: v7x
topology: tpu7x:2x2x1
jax: 0.10.0
libtpu: 0.0.40
codegen_flags: <defaults>
</compile_context>

<pallas_src>
import math

import jax
import jax.numpy as jnp
from jax import lax
from jax.experimental import pallas as pl
from jax.experimental.pallas import tpu as pltpu


def _round_up(x, m):
    return (x + m - 1) // m * m


def _device_kind():
    try:
        return jax.devices()[0].device_kind.lower()
    except Exception:
        return ""


def _tile_caps(kind):
    """Per-generation (tm, tn, tk) caps.

    Each choice keeps the double-buffered working set inside that generation's
    default scoped-VMEM limit while pushing per-step arithmetic intensity
    toward the MXU/HBM roofline crossover.
    """
    if "v5" in kind and ("lite" in kind or "v5e" in kind):
        # ~7 MiB double-buffered (bf16 operands) << 16 MiB default scoped VMEM.
        return 512, 512, 1024
    if "v7" in kind:
        # tn/tk multiples of 256 (2x256^2 MXU); ~14 MiB worst case << 32 MiB.
        return 512, 1024, 1024
    # v6e-class default.
    return 512, 1024, 1024


# ---------------------------------------------------------------------------
# Pass 1 (two-pass path): one-shot weight quantization (STE.forward),
# elementwise over tiles of the UNPADDED weight.  Scalars arrive via SMEM.
# ---------------------------------------------------------------------------
def _quantize_weight_kernel(params_ref, w_ref, wq_ref):
    beta = params_ref[0]        # min(w) (asymmetric) or 0.0 (symmetric)
    q_scale = params_ref[1]     # step / alpha        or step / amax
    dq_scale = params_ref[2]    # alpha / step        or amax / step
    w = w_ref[...]
    wq = jnp.round((w - beta) * q_scale) * dq_scale + beta
    wq = jnp.where(w != 0.0, wq, 0.0)      # weight_mask: zeros stay zero
    wq_ref[...] = wq.astype(wq_ref.dtype)  # bf16 out


# ---------------------------------------------------------------------------
# Pass 2: tiled matmul  y = x @ Wq.T + b, accumulating directly in the
# resident f32 output block (no scratch).
# ---------------------------------------------------------------------------
def _matmul_kernel(x_ref, w_ref, b_ref, o_ref):
    k = pl.program_id(2)

    @pl.when(k == 0)
    def _():
        o_ref[...] = jnp.zeros_like(o_ref)

    # Contract x dim 1 against w dim 1 directly (weight stays (N, K) layout).
    o_ref[...] += lax.dot_general(
        x_ref[...], w_ref[...],
        dimension_numbers=(((1,), (1,)), ((), ())),
        preferred_element_type=jnp.float32,
    )

    @pl.when(k == pl.num_programs(2) - 1)
    def _():
        o_ref[...] += b_ref[...]


# ---------------------------------------------------------------------------
# Fused path: quantize the f32 weight tile in-kernel, then matmul.  Used when
# the weight is visited at most twice (Mp//tm <= 2) so pre-materializing Wq
# would only add HBM traffic.
# ---------------------------------------------------------------------------
def _fused_matmul_kernel(params_ref, x_ref, w_ref, b_ref, o_ref):
    k = pl.program_id(2)
    beta = params_ref[0]
    q_scale = params_ref[1]
    dq_scale = params_ref[2]
    w = w_ref[...]
    wq = jnp.round((w - beta) * q_scale) * dq_scale + beta
    wq = jnp.where(w != 0.0, wq, 0.0).astype(jnp.bfloat16)  # bf16 MXU operand

    @pl.when(k == 0)
    def _():
        o_ref[...] = jnp.zeros_like(o_ref)

    o_ref[...] += lax.dot_general(
        x_ref[...], wq,
        dimension_numbers=(((1,), (1,)), ((), ())),
        preferred_element_type=jnp.float32,
    )

    @pl.when(k == pl.num_programs(2) - 1)
    def _():
        o_ref[...] += b_ref[...]


def _quant_params(weight, nbits, symmetric):
    """Global scale/offset (computed on the unpadded weight), folded form."""
    step = jnp.float32(2 ** nbits - 1)
    if symmetric:
        amax = jnp.max(jnp.abs(weight))
        scale = jnp.where(amax == 0, jnp.float32(1.0), amax)   # NaN guard
        beta = jnp.float32(0.0)
    else:
        wmin = jnp.min(weight)
        wmax = jnp.max(weight)
        alpha = wmax - wmin
        scale = jnp.where(alpha == 0, jnp.float32(1.0), alpha)  # NaN guard
        beta = wmin
    return jnp.stack([beta, step / scale, scale / step]).astype(jnp.float32)


def fp_linear(x, weight, bias, nbits=None, symmetric=False, *, tiles=None):
    """Forward pass of FP_Linear.

    x:      (batch, in_features) f32
    weight: (out_features, in_features) f32   (nn.Linear convention)
    bias:   (out_features,) f32
    tiles:  optional (tm, tn, tk) override (for testing).
    """
    batch, in_features = x.shape
    out_features, in_features_w = weight.shape
    assert in_features_w == in_features

    kind = _device_kind()
    tm_cap, tn_cap, tk_cap = tiles if tiles is not None else _tile_caps(kind)
    tm = min(tm_cap, _round_up(batch, 16))          # bf16: 2 rows / sublane
    tn = min(tn_cap, _round_up(out_features, 128))
    tk = min(tk_cap, _round_up(in_features, 128))
    Mp = _round_up(batch, tm)
    Np = _round_up(out_features, tn)
    Kp = _round_up(in_features, tk)

    # v7x has 2 TensorCores; make sure the "parallel" grid axes expose >= 2
    # blocks so one core is not idle (shrink tn before giving up).
    if "v7" in kind:
        while (Mp // tm) * (Np // tn) < 2 and tn > 128:
            tn = max(128, tn // 2)
            Np = _round_up(out_features, tn)

    m_blocks = Mp // tm

    # x in bf16 (MXU operand, f32 accumulation); zero-pad to tile multiples.
    xp = x.astype(jnp.bfloat16)
    if (Mp, Kp) != (batch, in_features):
        xp = jnp.pad(xp, ((0, Mp - batch), (0, Kp - in_features)))
    bp = bias if Np == out_features else jnp.pad(bias, (0, Np - out_features))
    bp = bp.reshape(1, Np).astype(jnp.float32)

    common = dict(
        out_shape=jax.ShapeDtypeStruct((Mp, Np), jnp.float32),
        grid=(Mp // tm, Np // tn, Kp // tk),
        out_specs=pl.BlockSpec((tm, tn), lambda i, j, k: (i, j)),
        compiler_params=pltpu.CompilerParams(
            dimension_semantics=("parallel", "parallel", "arbitrary"),
            vmem_limit_bytes=32 * 1024 * 1024),
    )

    quantize = (nbits is not None) and (nbits != 0)
    fused = quantize and m_blocks <= 2   # weight visited <= 2 times: fuse

    if fused:
        params = _quant_params(weight, nbits, symmetric)
        wp = weight
        if (Np, Kp) != (out_features, in_features):
            # Padded zeros stay zero through the quant mask -> contribute 0.
            wp = jnp.pad(weight, ((0, Np - out_features), (0, Kp - in_features)))
        out = pl.pallas_call(
            _fused_matmul_kernel,
            in_specs=[
                pl.BlockSpec(memory_space=pltpu.MemorySpace.SMEM),   # params
                pl.BlockSpec((tm, tk), lambda i, j, k: (i, k)),      # x
                pl.BlockSpec((tn, tk), lambda i, j, k: (j, k)),      # W (N, K) f32
                pl.BlockSpec((1, tn), lambda i, j, k: (0, j)),       # bias
            ],
            **common,
        )(params, xp, wp, bp)
    else:
        if not quantize:
            if nbits == 0:
                wq = jnp.zeros((Np, Kp), jnp.bfloat16)
            else:  # nbits is None: no quantization
                wq = weight.astype(jnp.bfloat16)
                if (Np, Kp) != (out_features, in_features):
                    wq = jnp.pad(wq, ((0, Np - out_features),
                                      (0, Kp - in_features)))
        else:
            params = _quant_params(weight, nbits, symmetric)
            # Pass 1 on the UNPADDED f32 weight; pad the bf16 result after.
            qn = out_features if out_features <= 512 else 512
            qk = in_features if in_features <= 1024 else 1024
            wq = pl.pallas_call(
                _quantize_weight_kernel,
                out_shape=jax.ShapeDtypeStruct((out_features, in_features),
                                               jnp.bfloat16),
                grid=(pl.cdiv(out_features, qn), pl.cdiv(in_features, qk)),
                in_specs=[
                    pl.BlockSpec(memory_space=pltpu.MemorySpace.SMEM),
                    pl.BlockSpec((qn, qk), lambda i, j: (i, j)),
                ],
                out_specs=pl.BlockSpec((qn, qk), lambda i, j: (i, j)),
                compiler_params=pltpu.CompilerParams(
                    dimension_semantics=("parallel", "parallel")),
            )(params, weight)
            if (Np, Kp) != (out_features, in_features):
                wq = jnp.pad(wq, ((0, Np - out_features),
                                  (0, Kp - in_features)))

        out = pl.pallas_call(
            _matmul_kernel,
            in_specs=[
                pl.BlockSpec((tm, tk), lambda i, j, k: (i, k)),   # x
                pl.BlockSpec((tn, tk), lambda i, j, k: (j, k)),   # Wq (N, K)
                pl.BlockSpec((1, tn), lambda i, j, k: (0, j)),    # bias
            ],
            **common,
        )(xp, wq, bp)

    if (Mp, Np) != (batch, out_features):
        out = out[:batch, :out_features]
    return out


# TODO(synk): STE.backward (straight-through gradient) is not implemented;
# this script covers the forward pass only.

if __name__ == "__main__":

    def quantize_ref(w, nbits, symmetric):
        # Pure-JAX reference of STE.forward (algebraically identical to the
        # PyTorch formula; same folded scale form as the kernels).
        if nbits is None:
            return w
        if nbits == 0:
            return w * 0.0
        step = jnp.float32(2 ** nbits - 1)
        if symmetric:
            amax = jnp.max(jnp.abs(w))
            scale = jnp.where(amax == 0, jnp.float32(1.0), amax)
            beta = jnp.float32(0.0)
        else:
            wmin, wmax = jnp.min(w), jnp.max(w)
            alpha = wmax - wmin
            scale = jnp.where(alpha == 0, jnp.float32(1.0), alpha)
            beta = wmin
        wq = jnp.round((w - beta) * (step / scale)) * (scale / step) + beta
        return jnp.where(w != 0.0, wq, 0.0)

    configs = [
        # (batch, in_f, out_f, nbits, symmetric, tile_override)
        (32, 384, 200, 4, False, (16, 128, 128)),  # Mp//tm=2 -> fused path
        (48, 256, 192, 3, True, (16, 128, 128)),   # Mp//tm=3 -> two-pass path
        (4, 32, 16, None, False, None),            # no quantization path
        (8, 64, 48, 0, False, None),               # nbits=0 path (all zeros)
    ]

    for idx, (batch, fin, fout, nbits, sym, tiles) in enumerate(configs):
        k_x, k_w, k_b = jax.random.split(
            jax.random.fold_in(jax.random.PRNGKey(0), idx), 3)

        # Param init matching FP_Linear.__init__ / nn.Linear defaults.
        w_std = math.sqrt(2.0 / (fin + fout))
        weight = w_std * jax.random.normal(k_w, (fout, fin), jnp.float32)
        b_bound = 1.0 / math.sqrt(fin)
        bias = jax.random.uniform(k_b, (fout,), jnp.float32,
                                  minval=-b_bound, maxval=b_bound)
        x = jax.random.normal(k_x, (batch, fin), jnp.float32)

        out = fp_linear(x, weight, bias, nbits=nbits, symmetric=sym,
                        tiles=tiles)
        out = jax.block_until_ready(out)

        ref = x @ quantize_ref(weight, nbits, sym).T + bias[None, :]
        # Loose tolerance: kernels feed the MXU bf16 operands (f32 accumulate).
        assert jnp.allclose(out, ref, atol=5e-2, rtol=5e-2), (
            f"config {idx}: max abs err "
            f"{float(jnp.max(jnp.abs(out - ref)))}")

    print("KERNEL_OK")
</pallas_src>

<mosaic_0001>
module attributes {stable_mosaic.version = 11 : i64} {
  func.func @_fused_matmul_kernel(%arg0: i32, %arg1: i32, %arg2: i32, %arg3: memref<3xf32, #tpu.memory_space<smem>>, %arg4: memref<16x128xbf16, #tpu.memory_space<vmem>>, %arg5: memref<128x128xf32, #tpu.memory_space<vmem>>, %arg6: memref<1x128xf32, #tpu.memory_space<vmem>>, %arg7: memref<16x128xf32, #tpu.memory_space<vmem>>) attributes {dimension_semantics = [#tpu.dimension_semantics<parallel>, #tpu.dimension_semantics<parallel>, #tpu.dimension_semantics<arbitrary>], iteration_bounds = array<i64: 2, 2, 3>, scalar_prefetch = 0 : i64, scratch_operands = 0 : i64, tpu.core_type = #tpu.core_type<tc>, window_params = [{transform_indices = @transform_0, window_bounds = array<i64: 3>}, {transform_indices = @transform_1, window_bounds = array<i64: 16, 128>}, {transform_indices = @transform_2, window_bounds = array<i64: 128, 128>}, {transform_indices = @transform_3, window_bounds = array<i64: 1, 128>}, {transform_indices = @transform_4, window_bounds = array<i64: 16, 128>}]} {
    %c0 = arith.constant 0 : index
    %0 = memref.load %arg3[%c0] : memref<3xf32, #tpu.memory_space<smem>>
    %c1 = arith.constant 1 : index
    %1 = memref.load %arg3[%c1] : memref<3xf32, #tpu.memory_space<smem>>
    %c2 = arith.constant 2 : index
    %2 = memref.load %arg3[%c2] : memref<3xf32, #tpu.memory_space<smem>>
    %c0_0 = arith.constant 0 : index
    %c0_1 = arith.constant 0 : index
    %3 = vector.load %arg5[%c0_0, %c0_1] : memref<128x128xf32, #tpu.memory_space<vmem>>, vector<128x128xf32>
    %4 = vector.broadcast %0 : f32 to vector<128x128xf32>
    %5 = arith.subf %3, %4 : vector<128x128xf32>
    %6 = vector.broadcast %1 : f32 to vector<128x128xf32>
    %7 = arith.mulf %5, %6 : vector<128x128xf32>
    %8 = math.roundeven %7 : vector<128x128xf32>
    %9 = vector.broadcast %2 : f32 to vector<128x128xf32>
    %10 = arith.mulf %8, %9 : vector<128x128xf32>
    %11 = vector.broadcast %0 : f32 to vector<128x128xf32>
    %12 = arith.addf %10, %11 : vector<128x128xf32>
    %cst = arith.constant 0.000000e+00 : f32
    %13 = vector.broadcast %cst : f32 to vector<128x128xf32>
    %14 = arith.cmpf one, %3, %13 : vector<128x128xf32>
    %cst_2 = arith.constant 0.000000e+00 : f32
    %15 = vector.broadcast %cst_2 : f32 to vector<128x128xf32>
    %16 = arith.select %14, %12, %15 : vector<128x128xi1>, vector<128x128xf32>
    %17 = arith.truncf %16 : vector<128x128xf32> to vector<128x128xbf16>
    %c0_i32 = arith.constant 0 : i32
    %18 = arith.cmpi eq, %arg2, %c0_i32 : i32
    %19 = arith.extui %18 : i1 to i32
    %c0_i32_3 = arith.constant 0 : i32
    %20 = arith.cmpi ne, %19, %c0_i32_3 : i32
    scf.if %20 {
      %cst_12 = arith.constant 0.000000e+00 : f32
      %29 = vector.broadcast %cst_12 : f32 to vector<16x128xf32>
      %c0_13 = arith.constant 0 : index
      %c0_14 = arith.constant 0 : index
      %30 = vector.load %arg7[%c0_13, %c0_14] : memref<16x128xf32, #tpu.memory_space<vmem>>, vector<16x128xf32>
      tpu.vector_store %arg7[%c0_13, %c0_14], %29 {strides = array<i32>} : memref<16x128xf32, #tpu.memory_space<vmem>>, vector<16x128xf32>,
    } else {
    }
    %c0_4 = arith.constant 0 : index
    %c0_5 = arith.constant 0 : index
    %21 = vector.load %arg7[%c0_4, %c0_5] : memref<16x128xf32, #tpu.memory_space<vmem>>, vector<16x128xf32>
    %c0_6 = arith.constant 0 : index
    %c0_7 = arith.constant 0 : index
    %22 = vector.load %arg4[%c0_6, %c0_7] : memref<16x128xbf16, #tpu.memory_space<vmem>>, vector<16x128xbf16>
    %cst_8 = arith.constant dense<0.000000e+00> : vector<16x128xf32>
    %23 = tpu.matmul %22, %17, %cst_8 {dimension_numbers = #tpu.dot_dimension_numbers<[1], [1], [0], [0], [0, 0, 1, 0], [], []>} : vector<16x128xbf16>, vector<128x128xbf16>, vector<16x128xf32> -> vector<16x128xf32>
    %24 = arith.addf %21, %23 : vector<16x128xf32>
    %c0_9 = arith.constant 0 : index
    %c0_10 = arith.constant 0 : index
    %25 = vector.load %arg7[%c0_9, %c0_10] : memref<16x128xf32, #tpu.memory_space<vmem>>, vector<16x128xf32>
    tpu.vector_store %arg7[%c0_9, %c0_10], %24 {strides = array<i32>} : memref<16x128xf32, #tpu.memory_space<vmem>>, vector<16x128xf32>,
    %c2_i32 = arith.constant 2 : i32
    %26 = arith.cmpi eq, %arg2, %c2_i32 : i32
    %27 = arith.extui %26 : i1 to i32
    %c0_i32_11 = arith.constant 0 : i32
    %28 = arith.cmpi ne, %27, %c0_i32_11 : i32
    scf.if %28 {
      %c0_12 = arith.constant 0 : index
      %c0_13 = arith.constant 0 : index
      %29 = vector.load %arg7[%c0_12, %c0_13] : memref<16x128xf32, #tpu.memory_space<vmem>>, vector<16x128xf32>
      %c0_14 = arith.constant 0 : index
      %c0_15 = arith.constant 0 : index
      %30 = vector.load %arg6[%c0_14, %c0_15] : memref<1x128xf32, #tpu.memory_space<vmem>>, vector<1x128xf32>
      %31 = vector.broadcast %30 : vector<1x128xf32> to vector<16x128xf32>
      %32 = arith.addf %29, %31 : vector<16x128xf32>
      %c0_16 = arith.constant 0 : index
      %c0_17 = arith.constant 0 : index
      %33 = vector.load %arg7[%c0_16, %c0_17] : memref<16x128xf32, #tpu.memory_space<vmem>>, vector<16x128xf32>
      tpu.vector_store %arg7[%c0_16, %c0_17], %32 {strides = array<i32>} : memref<16x128xf32, #tpu.memory_space<vmem>>, vector<16x128xf32>,
    } else {
    }
    return
  }
  func.func @transform_0(%arg0: i32, %arg1: i32, %arg2: i32) -> i32 {
    %c0_i32 = arith.constant 0 : i32
    %c0_i32_0 = arith.constant 0 : i32
    return %c0_i32 : i32
  }
  func.func @transform_1(%arg0: i32, %arg1: i32, %arg2: i32) -> (i32, i32) {
    %c0_i32 = arith.constant 0 : i32
    return %arg0, %arg2 : i32, i32
  }
  func.func @transform_2(%arg0: i32, %arg1: i32, %arg2: i32) -> (i32, i32) {
    %c0_i32 = arith.constant 0 : i32
    return %arg1, %arg2 : i32, i32
  }
  func.func @transform_3(%arg0: i32, %arg1: i32, %arg2: i32) -> (i32, i32) {
    %c0_i32 = arith.constant 0 : i32
    %c0_i32_0 = arith.constant 0 : i32
    return %c0_i32, %arg1 : i32, i32
  }
  func.func @transform_4(%arg0: i32, %arg1: i32, %arg2: i32) -> (i32, i32) {
    %c0_i32 = arith.constant 0 : i32
    return %arg0, %arg1 : i32, i32
  }
}

</mosaic_0001>

<llo_original>
// kernel: tpu_custom_call.1
$region0: #{tpu_custom_call.1}
  #allocation0 [shape = 'u32[]', space=smem, size = 0x4, offset = 0x4, fixed_abs, tag = 'smem constant byte address 0x4 - core index']
  #allocation1 [shape = 'u32[144,128]{1,0:T(1,128)}', space=vmem, size = 0x12000, scoped, tag = 'internal scratch']
  %s0 = inlined_call_operand.hbm [shape: f32[3], index: 0, kind: input, shape index: {}]
  %s1 = inlined_call_operand.hbm [shape: bf16[32,384], index: 1, kind: input, shape index: {}]
  %s2 = inlined_call_operand.hbm [shape: f32[256,384], index: 2, kind: input, shape index: {}]
  %s3 = inlined_call_operand.vmem [shape: f32[1,256], index: 3, kind: input, shape index: {}]
  %s4 = inlined_call_operand.hbm [shape: f32[32,256], index: 4, kind: output, shape index: {}]
  %s5 = sld [smem:[#allocation0]]
  $region69: #{tpu_custom_call.1} parent=0
    _
  %s7 = ssub.s32 1, %s5
  %s8 = scalar_select 0, %s7, %s5
  $region1: #{tpu_custom_call.1} parent=0
    #allocation2 [shape = 'u8[512]{0}', space=smem, size = 0x200, scoped, tag = 'input window, operand 0, single buffered']
    #allocation3 [shape = 's32[2]{0}', space=sflag, size = 0x8, scoped, tag = 'scoped memory for tpu_custom_call.1']
    #allocation4 [shape = 's32[2]{0}', space=sflag, size = 0x8, scoped, tag = 'scoped memory for tpu_custom_call.1']
    #allocation5 [shape = 's32[2]{0}', space=sflag, size = 0x8, scoped, tag = 'scoped memory for tpu_custom_call.1']
    #allocation6 [shape = 'u8[8192]{0}', space=vmem, size = 0x2000, scoped, tag = 'input window, operand 1']
    #allocation7 [shape = 'u8[131072]{0}', space=vmem, size = 0x20000, scoped, tag = 'input window, operand 2']
    #allocation8 [shape = 's32[2]{0}', space=sflag, size = 0x8, scoped, tag = 'scoped memory for tpu_custom_call.1']
    #allocation9 [shape = 'u8[16384]{0}', space=vmem, size = 0x4000, scoped, tag = 'output window, operand 0']
    %9 = vsyncpa [#allocation5], 0
    %10 = vsyncpa [#allocation3], 0
    %s11 = scalar_lea.sflag [#allocation3], 1
    %12 = vsyncpa %s11, 0
    %13 = vsyncpa [#allocation8], 0
    %s14 = scalar_lea.sflag [#allocation8], 1
    %15 = vsyncpa %s14, 0
    %16 = vsyncpa [#allocation4], 0
    %s17 = scalar_lea.sflag [#allocation4], 1
    %18 = vsyncpa %s17, 0
    loop: start=0, step=1, limit=14
    $region2: #{tpu_custom_call.1} parent=1 // loop_pre_header
      _
    $region3: #{tpu_custom_call.1} parent=1 // loop_header
      %s20 = sphi 0, %s24
      %p21 = scmp.ge.s32.totalorder %s20, 14
      %s27 = sphi 0, %s46
      %s28 = sphi 0, %s42
      %s29 = sphi 0, %s38
      %s30 = sphi 0, %s27
      %s31 = sphi 0, %s28
      %s32 = sphi 0, %s29
      %s33 = sphi 0, %s30
      %s34 = sphi 0, %s31
      %s35 = sphi 0, %s32
      %s47 = sphi 0, %s47
      %s49 = sphi 0, %s47
      %s50 = sphi 0, %s49
      %s64 = sphi 0, %s50
      %s72 = sphi 0, %s74
      %s75 = sphi 0, %s72
      %s76 = sphi 0, %s75
      %s92 = sphi 0, %s76
      %s100 = sphi 0, %s102
      %s103 = sphi 0, %s100
      %s104 = sphi 0, %s103
      %s120 = sphi 0, %s104
      %s126 = sphi 0, %s128
      %s129 = sphi 0, %s126
      %s130 = sphi 0, %s129
      %s146 = sphi 0, %s130
      %s154 = sphi 0, %s156
      %s157 = sphi 0, %s154
      %s158 = sphi 0, %s157
      %s174 = sphi 0, %s158
    $region4: #{tpu_custom_call.1} parent=1 // loop_header_branch
      %23 = sbr.rel (%p21) target = $region8
    $region5: #{tpu_custom_call.1} parent=1 // loop_body
      %s25 = ssub.s32 %s20, 1
      %s26 = ssub.s32 %s20, 2
      %s36 = sadd.s32 1, %s29
      %p37 = scmp.ge.s32.totalorder %s36, 3
      %s38 = scalar_select %p37, 0, %s36
      %s39 = sadd.s32 1, %s28
      %s40 = scalar_select %p37, %s39, %s28
      %p41 = scmp.ge.s32.totalorder %s40, 2
      %s42 = scalar_select %p41, 0, %s40
      %s43 = sadd.s32 1, %s27
      %s44 = scalar_select %p41, %s43, %s27
      %p45 = scmp.ge.s32.totalorder %s44, 2
      %s46 = scalar_select %p45, 0, %s44
      %s48 = sadd.s32 %s47, 1
      %p51 = scmp.eq.s32.totalorder %s20, 11
      %p52 = scmp.ne.s32.totalorder %s47, %s49
      %p53 = scmp.eq.s32.totalorder %s20, 0
      %p54 = por %p52, %p53
      %p55 = scmp.ne.s32.totalorder %s47, %s49
      %p56 = scmp.eq.s32.totalorder %s25, 11
      %p57 = por %p55, %p56
      %p58 = scmp.ne.s32.totalorder %s49, %s50
      %p59 = scmp.eq.s32.totalorder %s25, 0
      %p60 = por %p58, %p59
      %p61 = scmp.ne.s32.totalorder %s49, %s50
      %p62 = scmp.eq.s32.totalorder %s26, 11
      %p63 = por %p61, %p62
      %p65 = scmp.ne.s32.totalorder %s50, %s64
      %p66 = scmp.eq.s32.totalorder %s26, 0
      %p67 = por %p65, %p66
      %s68 = ssub.s32 %s27, %s46
      %s69 = ssub.s32 %s29, %s38
      %s70 = sor.u32 %s68, %s69
      %p71 = scmp.eq.s32.totalorder %s70, 0
      %s73 = sadd.s32 %s72, 1
      %s74 = scalar_select %p71, %s72, %s73
      %p77 = pneg %p71
      %p78 = scmp.eq.s32.totalorder %s20, 11
      %p79 = por %p77, %p78
      %p80 = scmp.ne.s32.totalorder %s72, %s75
      %p81 = scmp.eq.s32.totalorder %s20, 0
      %p82 = por %p80, %p81
      %p83 = scmp.ne.s32.totalorder %s72, %s75
      %p84 = scmp.eq.s32.totalorder %s25, 11
      %p85 = por %p83, %p84
      %p86 = scmp.ne.s32.totalorder %s75, %s76
      %p87 = scmp.eq.s32.totalorder %s25, 0
      %p88 = por %p86, %p87
      %p89 = scmp.ne.s32.totalorder %s75, %s76
      %p90 = scmp.eq.s32.totalorder %s26, 11
      %p91 = por %p89, %p90
      %p93 = scmp.ne.s32.totalorder %s76, %s92
      %p94 = scmp.eq.s32.totalorder %s26, 0
      %p95 = por %p93, %p94
      %s96 = ssub.s32 %s28, %s42
      %s97 = ssub.s32 %s29, %s38
      %s98 = sor.u32 %s96, %s97
      %p99 = scmp.eq.s32.totalorder %s98, 0
      %s101 = sadd.s32 %s100, 1
      %s102 = scalar_select %p99, %s100, %s101
      %p105 = pneg %p99
      %p106 = scmp.eq.s32.totalorder %s20, 11
      %p107 = por %p105, %p106
      %p108 = scmp.ne.s32.totalorder %s100, %s103
      %p109 = scmp.eq.s32.totalorder %s20, 0
      %p110 = por %p108, %p109
      %p111 = scmp.ne.s32.totalorder %s100, %s103
      %p112 = scmp.eq.s32.totalorder %s25, 11
      %p113 = por %p111, %p112
      %p114 = scmp.ne.s32.totalorder %s103, %s104
      %p115 = scmp.eq.s32.totalorder %s25, 0
      %p116 = por %p114, %p115
      %p117 = scmp.ne.s32.totalorder %s103, %s104
      %p118 = scmp.eq.s32.totalorder %s26, 11
      %p119 = por %p117, %p118
      %p121 = scmp.ne.s32.totalorder %s104, %s120
      %p122 = scmp.eq.s32.totalorder %s26, 0
      %p123 = por %p121, %p122
      %s124 = ssub.s32 %s28, %s42
      %p125 = scmp.eq.s32.totalorder %s124, 0
      %s127 = sadd.s32 %s126, 1
      %s128 = scalar_select %p125, %s126, %s127
      %p131 = pneg %p125
      %p132 = scmp.eq.s32.totalorder %s20, 11
      %p133 = por %p131, %p132
      %p134 = scmp.ne.s32.totalorder %s126, %s129
      %p135 = scmp.eq.s32.totalorder %s20, 0
      %p136 = por %p134, %p135
      %p137 = scmp.ne.s32.totalorder %s126, %s129
      %p138 = scmp.eq.s32.totalorder %s25, 11
      %p139 = por %p137, %p138
      %p140 = scmp.ne.s32.totalorder %s129, %s130
      %p141 = scmp.eq.s32.totalorder %s25, 0
      %p142 = por %p140, %p141
      %p143 = scmp.ne.s32.totalorder %s129, %s130
      %p144 = scmp.eq.s32.totalorder %s26, 11
      %p145 = por %p143, %p144
      %p147 = scmp.ne.s32.totalorder %s130, %s146
      %p148 = scmp.eq.s32.totalorder %s26, 0
      %p149 = por %p147, %p148
      %s150 = ssub.s32 %s27, %s46
      %s151 = ssub.s32 %s28, %s42
      %s152 = sor.u32 %s150, %s151
      %p153 = scmp.eq.s32.totalorder %s152, 0
      %s155 = sadd.s32 %s154, 1
      %s156 = scalar_select %p153, %s154, %s155
      %p159 = pneg %p153
      %p160 = scmp.eq.s32.totalorder %s20, 11
      %p161 = por %p159, %p160
      %p162 = scmp.ne.s32.totalorder %s154, %s157
      %p163 = scmp.eq.s32.totalorder %s20, 0
      %p164 = por %p162, %p163
      %p165 = scmp.ne.s32.totalorder %s154, %s157
      %p166 = scmp.eq.s32.totalorder %s25, 11
      %p167 = por %p165, %p166
      %p168 = scmp.ne.s32.totalorder %s157, %s158
      %p169 = scmp.eq.s32.totalorder %s25, 0
      %p170 = por %p168, %p169
      %p171 = scmp.ne.s32.totalorder %s157, %s158
      %p172 = scmp.eq.s32.totalorder %s26, 11
      %p173 = por %p171, %p172
      %p175 = scmp.ne.s32.totalorder %s158, %s174
      %p176 = scmp.eq.s32.totalorder %s26, 0
      %p177 = por %p175, %p176
      %p178 = scmp.le.s32.totalorder 1, %s20
      %p179 = scmp.lt.s32.totalorder %s20, 13
      %p180 = pnand %p178, %p179
      %p181 = pneg %p180
      // Predicated region
      $region9: #{tpu_custom_call.1} parent=5 // pred_check
        _
      $region10: #{tpu_custom_call.1} parent=5 // pred_check_branch
        %183 = sbr.rel (%p180) target = $region12
      $region11: #{tpu_custom_call.1} parent=5 // pred_region
        %s184 = ssub.s32 %s20, 1
        // Predicated region
        $region13: #{tpu_custom_call.1} parent=11 // pred_check
          %p185 = pneg %p60
        $region14: #{tpu_custom_call.1} parent=11 // pred_check_branch
          %187 = sbr.rel (%p185) target = $region16
        $region15: #{tpu_custom_call.1} parent=11 // pred_region
          %s189 = ssub.s32 16, 16
          %190 = vsyncadd [#allocation5], %s189
          %193 = dma.hbm_to_smem %s0, 16, [#allocation2], [#allocation5]
        $region16: #{tpu_custom_call.1} parent=11 // pred_fallthru
          _
      $region12: #{tpu_custom_call.1} parent=5 // pred_fallthru
        _
      %p194 = scmp.lt.s32.totalorder %s20, 12
      // Predicated region
      $region17: #{tpu_custom_call.1} parent=5 // pred_check
        %p195 = pneg %p194
      $region18: #{tpu_custom_call.1} parent=5 // pred_check_branch
        %197 = sbr.rel (%p195) target = $region20
      $region19: #{tpu_custom_call.1} parent=5 // pred_region
        // Predicated region
        $region21: #{tpu_custom_call.1} parent=19 // pred_check
          %p198 = pneg %p82
        $region22: #{tpu_custom_call.1} parent=19 // pred_check_branch
          %200 = sbr.rel (%p198) target = $region24
        $region23: #{tpu_custom_call.1} parent=19 // pred_region
          %s201 = sand.u32 %s72, 1
          %s202 = scalar_lea.sflag [#allocation3], %s201
          %s203 = sand.u32 %s72, 1
          %s204 = smul.addr %s203, 8
          %s205 = scalar_lea.vmem [#allocation6], %s204
          %s206 = smul.u32 2, %s27
          %s208 = ssub.s32 128, 128
          %209 = vsyncadd %s202, %s208
          %s210 = smul.addr %s206, 3
          %s211 = sadd.s32 %s29, %s210
          %s212 = smul.addr %s211, 64
          %s213 = scalar_lea.hbm %s1, %s212
          %s214 = sshll.u32 %s205, 4
          %s215 = int_to_ptr.vmem [resolvable:$true] %s214
          %220 = dma.hbm_to_vmem [thread:$0]  %s213, 128, %s215, %s202, 192, 64, 4
        $region24: #{tpu_custom_call.1} parent=19 // pred_fallthru
          _
        // Predicated region
        $region25: #{tpu_custom_call.1} parent=19 // pred_check
          %p221 = pneg %p110
        $region26: #{tpu_custom_call.1} parent=19 // pred_check_branch
          %223 = sbr.rel (%p221) target = $region28
        $region27: #{tpu_custom_call.1} parent=19 // pred_region
          %s224 = sand.u32 %s100, 1
          %s225 = scalar_lea.sflag [#allocation8], %s224
          %s226 = sand.u32 %s100, 1
          %s227 = smul.addr %s226, 128
          %s228 = scalar_lea.vmem [#allocation7], %s227
          %s229 = smul.u32 16, %s28
          %s231 = ssub.s32 2048, 2048
          %232 = vsyncadd %s225, %s231
          %s233 = smul.addr %s229, 3
          %s234 = sadd.s32 %s29, %s233
          %s235 = smul.addr %s234, 128
          %s236 = scalar_lea.hbm %s2, %s235
          %s237 = sshll.u32 %s228, 4
          %s238 = int_to_ptr.vmem [resolvable:$true] %s237
          %243 = dma.hbm_to_vmem [thread:$0]  %s236, 2048, %s238, %s225, 384, 128, 8
        $region28: #{tpu_custom_call.1} parent=19 // pred_fallthru
          _
        // Predicated region
        $region29: #{tpu_custom_call.1} parent=19 // pred_check
          %p244 = pneg %p136
        $region30: #{tpu_custom_call.1} parent=19 // pred_check_branch
          %246 = sbr.rel (%p244) target = $region32
        $region31: #{tpu_custom_call.1} parent=19 // pred_region
          %p247 = scmp.lt.s32.totalorder %s28, 1
          %s248 = scalar_select %p247, %s28, 1
          %s249 = scalar_lea.vmem %s3, %s248
        $region32: #{tpu_custom_call.1} parent=19 // pred_fallthru
          _
      $region20: #{tpu_custom_call.1} parent=5 // pred_fallthru
        _
      %p250 = scmp.le.s32.totalorder 1, %s20
      %p251 = scmp.lt.s32.totalorder %s20, 13
      %p252 = pnand %p250, %p251
      %p253 = pneg %p252
      // Predicated region
      $region33: #{tpu_custom_call.1} parent=5 // pred_check
        _
      $region34: #{tpu_custom_call.1} parent=5 // pred_check_branch
        %255 = sbr.rel (%p252) target = $region36
      $region35: #{tpu_custom_call.1} parent=5 // pred_region
        %s256 = ssub.s32 %s20, 1
        // Predicated region
        $region37: #{tpu_custom_call.1} parent=35 // pred_check
          %p257 = pneg %p60
        $region38: #{tpu_custom_call.1} parent=35 // pred_check_branch
          %259 = sbr.rel (%p257) target = $region40
        $region39: #{tpu_custom_call.1} parent=35 // pred_region
          %260 = dma.done [#allocation5], 16
        $region40: #{tpu_custom_call.1} parent=35 // pred_fallthru
          _
        %s261 = sand.u32 %s75, 1
        %s262 = scalar_lea.sflag [#allocation3], %s261
        %s263 = sand.u32 %s75, 1
        %s264 = smul.addr %s263, 8
        %s265 = scalar_lea.vmem [#allocation6], %s264
        // Predicated region
        $region41: #{tpu_custom_call.1} parent=35 // pred_check
          %p266 = pneg %p88
        $region42: #{tpu_custom_call.1} parent=35 // pred_check_branch
          %268 = sbr.rel (%p266) target = $region44
        $region43: #{tpu_custom_call.1} parent=35 // pred_region
          %269 = dma.done %s262, 128
        $region44: #{tpu_custom_call.1} parent=35 // pred_fallthru
          _
        %s270 = sand.u32 %s103, 1
        %s271 = scalar_lea.sflag [#allocation8], %s270
        %s272 = sand.u32 %s103, 1
        %s273 = smul.addr %s272, 128
        %s274 = scalar_lea.vmem [#allocation7], %s273
        // Predicated region
        $region45: #{tpu_custom_call.1} parent=35 // pred_check
          %p275 = pneg %p116
        $region46: #{tpu_custom_call.1} parent=35 // pred_check_branch
          %277 = sbr.rel (%p275) target = $region48
        $region47: #{tpu_custom_call.1} parent=35 // pred_region
          %278 = dma.done %s271, 2048
        $region48: #{tpu_custom_call.1} parent=35 // pred_fallthru
          _
        %279 = sfence
        %p280 = pneg %p60
        %p281 = pneg %p57
        %s282 = sand.u32 %s75, 1
        %s283 = scalar_lea.sflag [#allocation3], %s282
        %s284 = sand.u32 %s75, 1
        %s285 = smul.addr %s284, 8
        %s286 = scalar_lea.vmem [#allocation6], %s285
        %p287 = pneg %p88
        %p288 = pneg %p85
        %s289 = sand.u32 %s103, 1
        %s290 = scalar_lea.sflag [#allocation8], %s289
        %s291 = sand.u32 %s103, 1
        %s292 = smul.addr %s291, 128
        %s293 = scalar_lea.vmem [#allocation7], %s292
        %p294 = pneg %p116
        %p295 = pneg %p113
        %p296 = scmp.lt.s32.totalorder %s31, 1
        %s297 = scalar_select %p296, %s31, 1
        %s298 = scalar_lea.vmem %s3, %s297
        %p299 = pneg %p142
        %p300 = pneg %p139
        %p301 = pneg %p170
        %p302 = pneg %p167
        %s303 = sand.u32 %s157, 1
        %s304 = scalar_lea.sflag [#allocation4], %s303
        %s305 = sand.u32 %s157, 1
        %s306 = smul.addr %s305, 16
        %s307 = scalar_lea.vmem [#allocation9], %s306
        %s308 = smul.u32 2, %s30
        %s309 = smul.u32 16, %s31
        %p310 = scmp.lt.s32.totalorder %s31, 1
        %s311 = scalar_select %p310, %s31, 1
        %s312 = scalar_lea.vmem %s3, %s311
        %s313 = smul.u32 2, %s30
        %s315 = sld [smem:[#allocation2]]
        %s316 = sld [smem:[#allocation2 + $0x1]]
        %s317 = sld [smem:[#allocation2 + $0x2]]
        %v318 = vld [vmem:[%s274] sm:$0xff]
        %v319 = vld [vmem:[%s274 + $0x8] sm:$0xff]
        %v320 = vld [vmem:[%s274 + $0x10] sm:$0xff]
        %v321 = vld [vmem:[%s274 + $0x18] sm:$0xff]
        %v322 = vld [vmem:[%s274 + $0x20] sm:$0xff]
        %v323 = vld [vmem:[%s274 + $0x28] sm:$0xff]
        %v324 = vld [vmem:[%s274 + $0x30] sm:$0xff]
        %v325 = vld [vmem:[%s274 + $0x38] sm:$0xff]
        %v326 = vld [vmem:[%s274 + $0x40] sm:$0xff]
        %v327 = vld [vmem:[%s274 + $0x48] sm:$0xff]
        %v328 = vld [vmem:[%s274 + $0x50] sm:$0xff]
        %v329 = vld [vmem:[%s274 + $0x58] sm:$0xff]
        %v330 = vld [vmem:[%s274 + $0x60] sm:$0xff]
        %v331 = vld [vmem:[%s274 + $0x68] sm:$0xff]
        %v332 = vld [vmem:[%s274 + $0x70] sm:$0xff]
        %v333 = vld [vmem:[%s274 + $0x78] sm:$0xff]
        %v334 = vstv %s315
        %v335 = vsub.f32 %v318, %v334
        %v336 = vsub.f32 %v319, %v334
        %v337 = vsub.f32 %v320, %v334
        %v338 = vsub.f32 %v321, %v334
        %v339 = vsub.f32 %v322, %v334
        %v340 = vsub.f32 %v323, %v334
        %v341 = vsub.f32 %v324, %v334
        %v342 = vsub.f32 %v325, %v334
        %v343 = vsub.f32 %v326, %v334
        %v344 = vsub.f32 %v327, %v334
        %v345 = vsub.f32 %v328, %v334
        %v346 = vsub.f32 %v329, %v334
        %v347 = vsub.f32 %v330, %v334
        %v348 = vsub.f32 %v331, %v334
        %v349 = vsub.f32 %v332, %v334
        %v350 = vsub.f32 %v333, %v334
        %v351 = vstv %s316
        %v352 = vmul.f32 %v335, %v351
        %v353 = vmul.f32 %v336, %v351
        %v354 = vmul.f32 %v337, %v351
        %v355 = vmul.f32 %v338, %v351
        %v356 = vmul.f32 %v339, %v351
        %v357 = vmul.f32 %v340, %v351
        %v358 = vmul.f32 %v341, %v351
        %v359 = vmul.f32 %v342, %v351
        %v360 = vmul.f32 %v343, %v351
        %v361 = vmul.f32 %v344, %v351
        %v362 = vmul.f32 %v345, %v351
        %v363 = vmul.f32 %v346, %v351
        %v364 = vmul.f32 %v347, %v351
        %v365 = vmul.f32 %v348, %v351
        %v366 = vmul.f32 %v349, %v351
        %v367 = vmul.f32 %v350, %v351
        %v368 = vround.ne.pseudo %v352
        %v369 = vround.ne.pseudo %v353
        %v370 = vround.ne.pseudo %v354
        %v371 = vround.ne.pseudo %v355
        %v372 = vround.ne.pseudo %v356
        %v373 = vround.ne.pseudo %v357
        %v374 = vround.ne.pseudo %v358
        %v375 = vround.ne.pseudo %v359
        %v376 = vround.ne.pseudo %v360
        %v377 = vround.ne.pseudo %v361
        %v378 = vround.ne.pseudo %v362
        %v379 = vround.ne.pseudo %v363
        %v380 = vround.ne.pseudo %v364
        %v381 = vround.ne.pseudo %v365
        %v382 = vround.ne.pseudo %v366
        %v383 = vround.ne.pseudo %v367
        %v384 = vstv %s317
        %v385 = vmul.f32 %v368, %v384
        %v386 = vmul.f32 %v369, %v384
        %v387 = vmul.f32 %v370, %v384
        %v388 = vmul.f32 %v371, %v384
        %v389 = vmul.f32 %v372, %v384
        %v390 = vmul.f32 %v373, %v384
        %v391 = vmul.f32 %v374, %v384
        %v392 = vmul.f32 %v375, %v384
        %v393 = vmul.f32 %v376, %v384
        %v394 = vmul.f32 %v377, %v384
        %v395 = vmul.f32 %v378, %v384
        %v396 = vmul.f32 %v379, %v384
        %v397 = vmul.f32 %v380, %v384
        %v398 = vmul.f32 %v381, %v384
        %v399 = vmul.f32 %v382, %v384
        %v400 = vmul.f32 %v383, %v384
        %v401 = vadd.f32 %v385, %v334
        %v402 = vadd.f32 %v386, %v334
        %v403 = vadd.f32 %v387, %v334
        %v404 = vadd.f32 %v388, %v334
        %v405 = vadd.f32 %v389, %v334
        %v406 = vadd.f32 %v390, %v334
        %v407 = vadd.f32 %v391, %v334
        %v408 = vadd.f32 %v392, %v334
        %v409 = vadd.f32 %v393, %v334
        %v410 = vadd.f32 %v394, %v334
        %v411 = vadd.f32 %v395, %v334
        %v412 = vadd.f32 %v396, %v334
        %v413 = vadd.f32 %v397, %v334
        %v414 = vadd.f32 %v398, %v334
        %v415 = vadd.f32 %v399, %v334
        %v416 = vadd.f32 %v400, %v334
        %vm417 = vcmp.ne.f32.partialorder %v318, 0.0
        %vm418 = vcmp.ne.f32.partialorder %v319, 0.0
        %vm419 = vcmp.ne.f32.partialorder %v320, 0.0
        %vm420 = vcmp.ne.f32.partialorder %v321, 0.0
        %vm421 = vcmp.ne.f32.partialorder %v322, 0.0
        %vm422 = vcmp.ne.f32.partialorder %v323, 0.0
        %vm423 = vcmp.ne.f32.partialorder %v324, 0.0
        %vm424 = vcmp.ne.f32.partialorder %v325, 0.0
        %vm425 = vcmp.ne.f32.partialorder %v326, 0.0
        %vm426 = vcmp.ne.f32.partialorder %v327, 0.0
        %vm427 = vcmp.ne.f32.partialorder %v328, 0.0
        %vm428 = vcmp.ne.f32.partialorder %v329, 0.0
        %vm429 = vcmp.ne.f32.partialorder %v330, 0.0
        %vm430 = vcmp.ne.f32.partialorder %v331, 0.0
        %vm431 = vcmp.ne.f32.partialorder %v332, 0.0
        %vm432 = vcmp.ne.f32.partialorder %v333, 0.0
        %v433 = vsel %vm417, %v401, 0.0
        %v434 = vsel %vm418, %v402, 0.0
        %v435 = vsel %vm419, %v403, 0.0
        %v436 = vsel %vm420, %v404, 0.0
        %v437 = vsel %vm421, %v405, 0.0
        %v438 = vsel %vm422, %v406, 0.0
        %v439 = vsel %vm423, %v407, 0.0
        %v440 = vsel %vm424, %v408, 0.0
        %v441 = vsel %vm425, %v409, 0.0
        %v442 = vsel %vm426, %v410, 0.0
        %v443 = vsel %vm427, %v411, 0.0
        %v444 = vsel %vm428, %v412, 0.0
        %v445 = vsel %vm429, %v413, 0.0
        %v446 = vsel %vm430, %v414, 0.0
        %v447 = vsel %vm431, %v415, 0.0
        %v448 = vsel %vm432, %v416, 0.0
        %v449 = vpack.c.bf16 %v434, %v433
        %v450 = vpack.c.bf16 %v436, %v435
        %v451 = vpack.c.bf16 %v438, %v437
        %v452 = vpack.c.bf16 %v440, %v439
        %v453 = vpack.c.bf16 %v442, %v441
        %v454 = vpack.c.bf16 %v444, %v443
        %v455 = vpack.c.bf16 %v446, %v445
        %v456 = vpack.c.bf16 %v448, %v447
        %p457 = scmp.eq.s32.totalorder %s32, 0
        // Predicated region
        $region49: #{tpu_custom_call.1} parent=35 // pred_check
          %p458 = pneg %p457
        $region50: #{tpu_custom_call.1} parent=35 // pred_check_branch
          %460 = sbr.rel (%p458) target = $region52
        $region51: #{tpu_custom_call.1} parent=35 // pred_region
          %461 = vst [vmem:[%s307] sm:$0xff] 0.0
          %462 = vst [vmem:[%s307 + $0x8] sm:$0xff] 0.0
        $region52: #{tpu_custom_call.1} parent=35 // pred_fallthru
          _
        %v463 = vld [vmem:[%s307] sm:$0xff]
        %v464 = vld [vmem:[%s307 + $0x8] sm:$0xff]
        %v465 = vld [vmem:[%s265] sm:$0xf]
        %v466 = vld [vmem:[%s265 + $0x4] sm:$0xf]
        %v469 = vunpack.c.l.b16 %v465
        %v470 = vunpack.c.l.b16 %v466
        %v471 = vpack.c.b16 %v470, %v469
        %473 = vmatprep.subr.bf16.mxu0 0
        %474 = vmatpush1.bf16.xpose.msra.mxu0 %v449
        %475 = vmatprep.subr.bf16.mxu0 0
        %476 = vmatpush1.bf16.xpose.msra.mxu0 %v450
        %477 = vmatprep.subr.bf16.mxu0 0
        %478 = vmatpush1.bf16.xpose.msra.mxu0 %v451
        %479 = vmatprep.subr.bf16.mxu0 0
        %480 = vmatpush1.bf16.xpose.msra.mxu0 %v452
        %481 = vmatprep.subr.bf16.mxu0 0
        %482 = vmatpush1.bf16.xpose.msra.mxu0 %v453
        %483 = vmatprep.subr.bf16.mxu0 0
        %484 = vmatpush1.bf16.xpose.msra.mxu0 %v454
        %485 = vmatprep.subr.bf16.mxu0 0
        %486 = vmatpush1.bf16.xpose.msra.mxu0 %v455
        %487 = vmatprep.subr.bf16.mxu0 0
        %488 = vmatpush1.bf16.xpose.msra.mxu0 %v456
        %489 = vmatprep.subr.bf16.mxu0 0
        %490 = vmatpush1.bf16.xpose.msra.mxu0 0
        %491 = vmatprep.subr.bf16.mxu0 0
        %492 = vmatpush1.bf16.xpose.msra.mxu0 0
        %493 = vmatprep.subr.bf16.mxu0 0
        %494 = vmatpush1.bf16.xpose.msra.mxu0 0
        %495 = vmatprep.subr.bf16.mxu0 0
        %496 = vmatpush1.bf16.xpose.msra.mxu0 0
        %497 = vmatprep.subr.bf16.mxu0 0
        %498 = vmatpush1.bf16.xpose.msra.mxu0 0
        %499 = vmatprep.subr.bf16.mxu0 0
        %500 = vmatpush1.bf16.xpose.msra.mxu0 0
        %501 = vmatprep.subr.bf16.mxu0 0
        %502 = vmatpush1.bf16.xpose.msra.mxu0 0
        %503 = vmatprep.subr.bf16.mxu0 0
        %504 = vmatpush1.bf16.xpose.msra.mxu0 0
        %505 = vmatprep.mubr.bf16.mxu0 0
        %506 = vmatmul.mubr.bf16.gmra.mrb[0].mxu0 %v471
        %v507 = vpop.f32.mrb[0].mxu0
        %v508 = vadd.f32 0.0, %v507
        %v509 = vpop.f32.mrb[0].mxu0
        %v510 = vpop.f32.mrb[0].mxu0
        %v511 = vadd.f32 0.0, %v510
        %v512 = vpop.f32.mrb[0].mxu0
        %513 = vdwg.mxu0
        %v514 = vadd.f32 %v463, %v508
        %v515 = vadd.f32 %v464, %v511
        %516 = vst [vmem:[%s307] sm:$0xff] %v514
        %517 = vst [vmem:[%s307 + $0x8] sm:$0xff] %v515
        %p518 = scmp.eq.s32.totalorder %s32, 2
        // Predicated region
        $region53: #{tpu_custom_call.1} parent=35 // pred_check
          %p519 = pneg %p518
        $region54: #{tpu_custom_call.1} parent=35 // pred_check_branch
          %521 = sbr.rel (%p519) target = $region56
        $region55: #{tpu_custom_call.1} parent=35 // pred_region
          %v522 = vld [vmem:[%s307] sm:$0xff]
          %v523 = vld [vmem:[%s307 + $0x8] sm:$0xff]
          %v524 = vld [vmem:[%s312] sm:$0x1]
          %v526 = vlaneseq
          %v527 = vshrl.u32 %v526, 7
          %v528 = vsub.s32 0, %v527
          %v529 = vrot.slane %v524, %v528
          %v531 = vadd.f32 %v522, %v529
          %v532 = vadd.f32 %v523, %v529
          %533 = vst [vmem:[%s307] sm:$0xff] %v531
          %534 = vst [vmem:[%s307 + $0x8] sm:$0xff] %v532
        $region56: #{tpu_custom_call.1} parent=35 // pred_fallthru
          _
        %s535 = sand.u32 %s157, 1
        %s536 = scalar_lea.sflag [#allocation4], %s535
        %s537 = sand.u32 %s157, 1
        %s538 = smul.addr %s537, 16
        %s539 = scalar_lea.vmem [#allocation9], %s538
        // Predicated region
        $region57: #{tpu_custom_call.1} parent=35 // pred_check
          %p540 = pneg %p167
        $region58: #{tpu_custom_call.1} parent=35 // pred_check_branch
          %542 = sbr.rel (%p540) target = $region60
        $region59: #{tpu_custom_call.1} parent=35 // pred_region
          %s543 = smul.u32 2, %s30
          %s545 = ssub.s32 256, 256
          %546 = vsyncadd %s536, %s545
          %s547 = smul.addr %s543, 2
          %s548 = sadd.s32 %s31, %s547
          %s549 = smul.addr %s548, 128
          %s550 = scalar_lea.hbm %s4, %s549
          %s551 = sshll.u32 %s539, 4
          %s552 = int_to_ptr.vmem [resolvable:$true] %s551
          %557 = dma.vmem_to_hbm [thread:$0]  %s552, 256, %s550, %s536, 128, 256, 8
        $region60: #{tpu_custom_call.1} parent=35 // pred_fallthru
          _
      $region36: #{tpu_custom_call.1} parent=5 // pred_fallthru
        _
      %p558 = scmp.le.s32.totalorder 2, %s20
      // Predicated region
      $region61: #{tpu_custom_call.1} parent=5 // pred_check
        %p559 = pneg %p558
      $region62: #{tpu_custom_call.1} parent=5 // pred_check_branch
        %561 = sbr.rel (%p559) target = $region64
      $region63: #{tpu_custom_call.1} parent=5 // pred_region
        %s562 = ssub.s32 %s20, 2
        // Predicated region
        $region65: #{tpu_custom_call.1} parent=63 // pred_check
          %p563 = pneg %p173
        $region66: #{tpu_custom_call.1} parent=63 // pred_check_branch
          %565 = sbr.rel (%p563) target = $region68
        $region67: #{tpu_custom_call.1} parent=63 // pred_region
          %s566 = sand.u32 %s158, 1
          %s567 = scalar_lea.sflag [#allocation4], %s566
          %s568 = sand.u32 %s158, 1
          %s569 = smul.addr %s568, 16
          %s570 = scalar_lea.vmem [#allocation9], %s569
          %571 = dma.done %s567, 256
        $region68: #{tpu_custom_call.1} parent=63 // pred_fallthru
          _
      $region64: #{tpu_custom_call.1} parent=5 // pred_fallthru
        _
    $region6: #{tpu_custom_call.1} parent=1 // loop_footer
      %s24 = sadd.s32 1, %s20
    $region7: #{tpu_custom_call.1} parent=1 // loop_footer_branch
      %19 = sbr.rel target = $region3
    $region8: #{tpu_custom_call.1} parent=1 // loop_exit
      _
    %572 = vsyncpa [#allocation3], 1
    %s573 = scalar_lea.sflag [#allocation3], 1
    %574 = vsyncpa %s573, 1
    %575 = vsyncpa [#allocation8], 1
    %s576 = scalar_lea.sflag [#allocation8], 1
    %577 = vsyncpa %s576, 1
    %578 = vsyncpa [#allocation4], 1
    %s579 = scalar_lea.sflag [#allocation4], 1
    %580 = vsyncpa %s579, 1
    %581 = vsyncpa [#allocation5], 1
    %s582 = scalar_lea.sflag [#allocation5], 1
    %583 = vsyncpa %s582, 1

</llo_original>
